<compile_context>
chip_gen: v6e
topology: v6e:2x2x1
jax: 0.10.0
libtpu: 0.0.40
codegen_flags: <defaults>
</compile_context>

<pallas_src>
import jax
import jax.numpy as jnp
from jax.experimental import pallas as pl
from jax.experimental.pallas import tpu as pltpu


def _round_up(x, m):
    return ((x + m - 1) // m) * m


def _pick_batch_tile(B, block_b):
    """Batch tile: multiple of 16 (bf16 sublane-friendly), <= B, <= block_b.

    Guarantees >= 2 grid steps whenever B > 16 so the ("parallel",) grid can
    feed both v7x TensorCores; tiny batches get one full-batch tile.
    """
    if B <= 16:
        return B                                      # block dim == full array dim
    if B <= 2 * block_b:
        return min(block_b, _round_up(-(-B // 2), 16))  # ~two tiles
    return block_b


def _user_rating_embedding_kernel(x_ref, w1_ref, b1_ref, w2_ref, b2_ref, o_ref):
    # Layer 1: Linear(31 -> 256) on the lane-padded (tm, 32) bf16 block.
    # bf16 MXU inputs, f32 accumulation, fused bias + ReLU in f32.
    h = jnp.dot(x_ref[...], w1_ref[...], preferred_element_type=jnp.float32)
    h = jnp.maximum(h + b1_ref[...], 0.0)

    # Dropout is the identity at inference.
    # TODO(synk): training-mode dropout (pltpu.prng_seed / prng_random_bits) not implemented.

    # Layer 2: Linear(256 -> 256), bf16 MXU inputs, f32 accumulation + bias + ReLU.
    y = jnp.dot(h.astype(jnp.bfloat16), w2_ref[...],
                preferred_element_type=jnp.float32)
    o_ref[...] = jnp.maximum(y + b2_ref[...], 0.0)


def user_rating_embedding(x0, x1, x2, w1, b1, w2, b2, *, block_b=1024):
    """x0/x1/x2: [B, f_i] with sum(f_i) = 31; w1: [31, 256]; w2: [256, 256]."""
    B = x0.shape[0]
    d_in = x0.shape[1] + x1.shape[1] + x2.shape[1]
    d_h = w1.shape[1]
    d_out = w2.shape[1]
    assert w1.shape[0] == d_in and w2.shape[0] == d_h

    # Fused wrapper-side concat + zero lane-pad (31 -> 32) + bf16 cast: one
    # small HBM write, one clean (tm, 32) input DMA per grid step.
    d_in_p = _round_up(d_in, 8)
    x = jnp.concatenate([x0, x1, x2], axis=1)
    if d_in_p != d_in:
        x = jnp.pad(x, ((0, 0), (0, d_in_p - d_in)))
    x = x.astype(jnp.bfloat16)

    # Weights: matching zero K-row for w1, one-time bf16 cast; biases stay f32.
    w1p = jnp.pad(w1, ((0, d_in_p - d_in), (0, 0))).astype(jnp.bfloat16)
    w2b = w2.astype(jnp.bfloat16)
    b1_2d = b1.reshape(1, d_h).astype(jnp.float32)
    b2_2d = b2.reshape(1, d_out).astype(jnp.float32)

    tm = _pick_batch_tile(B, block_b)
    grid = (pl.cdiv(B, tm),)
    rows = grid[0] * tm                 # rows actually pushed through the MXU

    def resident(shape):
        # Constant block index -> fetched once, stays VMEM-resident across steps.
        return pl.BlockSpec(shape, lambda i: (0, 0))

    return pl.pallas_call(
        _user_rating_embedding_kernel,
        out_shape=jax.ShapeDtypeStruct((B, d_out), jnp.float32),
        grid=grid,
        in_specs=[
            pl.BlockSpec((tm, d_in_p), lambda i: (i, 0)),
            resident((d_in_p, d_h)), resident((1, d_h)),
            resident((d_h, d_out)), resident((1, d_out)),
        ],
        out_specs=pl.BlockSpec((tm, d_out), lambda i: (i, 0)),
        compiler_params=pltpu.CompilerParams(
            dimension_semantics=("parallel",)),
        cost_estimate=pl.CostEstimate(
            flops=2 * rows * (d_in_p * d_h + d_h * d_out),
            transcendentals=0,
            bytes_accessed=(2 * rows * d_in_p                  # bf16 input blocks
                            + 4 * rows * d_out                 # f32 output blocks
                            + 2 * (d_in_p * d_h + d_h * d_out) # bf16 resident weights
                            + 4 * (d_h + d_out))),             # f32 biases
    )(x, w1p, b1_2d, w2b, b2_2d)


if __name__ == "__main__":
    key = jax.random.PRNGKey(0)
    kw1, kb1, kw2, kb2 = jax.random.split(key, 4)

    F0, F1, F2 = 3, 7, 21              # concat -> 31 features = Linear(31, 256) input
    D_IN, D_H = F0 + F1 + F2, 256

    # Deterministic PyTorch-Linear-style uniform init.
    bnd1 = 1.0 / float(D_IN) ** 0.5
    w1 = jax.random.uniform(kw1, (D_IN, D_H), jnp.float32, -bnd1, bnd1)
    b1 = jax.random.uniform(kb1, (D_H,), jnp.float32, -bnd1, bnd1)
    bnd2 = 1.0 / float(D_H) ** 0.5
    w2 = jax.random.uniform(kw2, (D_H, D_H), jnp.float32, -bnd2, bnd2)
    b2 = jax.random.uniform(kb2, (D_H,), jnp.float32, -bnd2, bnd2)

    def ref_forward(x0, x1, x2):
        # Pure-JAX f32 reference: concat -> Linear -> ReLU -> (Dropout=id) -> Linear -> ReLU.
        x_cat = jnp.concatenate([x0, x1, x2], axis=1)
        h = jnp.maximum(x_cat @ w1 + b1, 0.0)
        return jnp.maximum(h @ w2 + b2, 0.0)

    # Exercise the single-tile path (B=8) and the multi-step / ragged-tail path
    # (B=37 -> tile 32, grid of 2, masked partial last block).
    for B in (8, 37):
        kx0, kx1, kx2 = jax.random.split(jax.random.fold_in(key, B), 3)
        x0 = jax.random.normal(kx0, (B, F0), dtype=jnp.float32)
        x1 = jax.random.normal(kx1, (B, F1), dtype=jnp.float32)
        x2 = jax.random.normal(kx2, (B, F2), dtype=jnp.float32)

        out = jax.block_until_ready(
            user_rating_embedding(x0, x1, x2, w1, b1, w2, b2))
        ref = ref_forward(x0, x1, x2)

        assert out.shape == (B, D_H)
        # bf16 MXU inputs vs. f32 reference -> ~1e-2 relative error expected.
        assert jnp.allclose(out, ref, atol=3e-2, rtol=3e-2), (
            "max abs err", float(jnp.max(jnp.abs(out - ref))))

    print("KERNEL_OK")
</pallas_src>

<mosaic_0001>
module attributes {stable_mosaic.version = 11 : i64} {
  func.func @_user_rating_embedding_kernel(%arg0: i32, %arg1: memref<8x32xbf16, #tpu.memory_space<vmem>>, %arg2: memref<32x256xbf16, #tpu.memory_space<vmem>>, %arg3: memref<1x256xf32, #tpu.memory_space<vmem>>, %arg4: memref<256x256xbf16, #tpu.memory_space<vmem>>, %arg5: memref<1x256xf32, #tpu.memory_space<vmem>>, %arg6: memref<8x256xf32, #tpu.memory_space<vmem>>) attributes {dimension_semantics = [#tpu.dimension_semantics<parallel>], iteration_bounds = array<i64: 1>, scalar_prefetch = 0 : i64, scratch_operands = 0 : i64, tpu.core_type = #tpu.core_type<tc>, window_params = [{transform_indices = @transform_0, window_bounds = array<i64: 8, 32>}, {pipeline_mode = #tpu.pipeline_mode<synchronous>, transform_indices = @transform_1, window_bounds = array<i64: 32, 256>}, {pipeline_mode = #tpu.pipeline_mode<synchronous>, transform_indices = @transform_2, window_bounds = array<i64: 1, 256>}, {pipeline_mode = #tpu.pipeline_mode<synchronous>, transform_indices = @transform_3, window_bounds = array<i64: 256, 256>}, {pipeline_mode = #tpu.pipeline_mode<synchronous>, transform_indices = @transform_4, window_bounds = array<i64: 1, 256>}, {transform_indices = @transform_5, window_bounds = array<i64: 8, 256>}]} {
    %c0 = arith.constant 0 : index
    %c0_0 = arith.constant 0 : index
    %0 = vector.load %arg1[%c0, %c0_0] : memref<8x32xbf16, #tpu.memory_space<vmem>>, vector<8x32xbf16>
    %c0_1 = arith.constant 0 : index
    %c0_2 = arith.constant 0 : index
    %1 = vector.load %arg2[%c0_1, %c0_2] : memref<32x256xbf16, #tpu.memory_space<vmem>>, vector<32x256xbf16>
    %cst = arith.constant dense<0.000000e+00> : vector<8x256xf32>
    %2 = tpu.matmul %0, %1, %cst {dimension_numbers = #tpu.dot_dimension_numbers<[1], [0], [0], [1], [0, 0, 1, 1], [], []>} : vector<8x32xbf16>, vector<32x256xbf16>, vector<8x256xf32> -> vector<8x256xf32>
    %c0_3 = arith.constant 0 : index
    %c0_4 = arith.constant 0 : index
    %3 = vector.load %arg3[%c0_3, %c0_4] : memref<1x256xf32, #tpu.memory_space<vmem>>, vector<1x256xf32>
    %4 = vector.broadcast %3 : vector<1x256xf32> to vector<8x256xf32>
    %5 = arith.addf %2, %4 : vector<8x256xf32>
    %cst_5 = arith.constant 0.000000e+00 : f32
    %6 = vector.broadcast %cst_5 : f32 to vector<8x256xf32>
    %7 = arith.maximumf %5, %6 : vector<8x256xf32>
    %8 = arith.truncf %7 : vector<8x256xf32> to vector<8x256xbf16>
    %c0_6 = arith.constant 0 : index
    %c0_7 = arith.constant 0 : index
    %9 = vector.load %arg4[%c0_6, %c0_7] : memref<256x256xbf16, #tpu.memory_space<vmem>>, vector<256x256xbf16>
    %cst_8 = arith.constant dense<0.000000e+00> : vector<8x256xf32>
    %10 = tpu.matmul %8, %9, %cst_8 {dimension_numbers = #tpu.dot_dimension_numbers<[1], [0], [0], [1], [0, 0, 1, 1], [], []>} : vector<8x256xbf16>, vector<256x256xbf16>, vector<8x256xf32> -> vector<8x256xf32>
    %c0_9 = arith.constant 0 : index
    %c0_10 = arith.constant 0 : index
    %11 = vector.load %arg5[%c0_9, %c0_10] : memref<1x256xf32, #tpu.memory_space<vmem>>, vector<1x256xf32>
    %12 = vector.broadcast %11 : vector<1x256xf32> to vector<8x256xf32>
    %13 = arith.addf %10, %12 : vector<8x256xf32>
    %cst_11 = arith.constant 0.000000e+00 : f32
    %14 = vector.broadcast %cst_11 : f32 to vector<8x256xf32>
    %15 = arith.maximumf %13, %14 : vector<8x256xf32>
    %c0_12 = arith.constant 0 : index
    %c0_13 = arith.constant 0 : index
    %16 = vector.load %arg6[%c0_12, %c0_13] : memref<8x256xf32, #tpu.memory_space<vmem>>, vector<8x256xf32>
    tpu.vector_store %arg6[%c0_12, %c0_13], %15 {strides = array<i32>} : memref<8x256xf32, #tpu.memory_space<vmem>>, vector<8x256xf32>,
    return
  }
  func.func @transform_0(%arg0: i32) -> (i32, i32) {
    %c0_i32 = arith.constant 0 : i32
    %c0_i32_0 = arith.constant 0 : i32
    return %arg0, %c0_i32 : i32, i32
  }
  func.func @transform_1(%arg0: i32) -> (i32, i32) {
    %c0_i32 = arith.constant 0 : i32
    %c0_i32_0 = arith.constant 0 : i32
    %c0_i32_1 = arith.constant 0 : i32
    return %c0_i32, %c0_i32_0 : i32, i32
  }
  func.func @transform_2(%arg0: i32) -> (i32, i32) {
    %c0_i32 = arith.constant 0 : i32
    %c0_i32_0 = arith.constant 0 : i32
    %c0_i32_1 = arith.constant 0 : i32
    return %c0_i32, %c0_i32_0 : i32, i32
  }
  func.func @transform_3(%arg0: i32) -> (i32, i32) {
    %c0_i32 = arith.constant 0 : i32
    %c0_i32_0 = arith.constant 0 : i32
    %c0_i32_1 = arith.constant 0 : i32
    return %c0_i32, %c0_i32_0 : i32, i32
  }
  func.func @transform_4(%arg0: i32) -> (i32, i32) {
    %c0_i32 = arith.constant 0 : i32
    %c0_i32_0 = arith.constant 0 : i32
    %c0_i32_1 = arith.constant 0 : i32
    return %c0_i32, %c0_i32_0 : i32, i32
  }
  func.func @transform_5(%arg0: i32) -> (i32, i32) {
    %c0_i32 = arith.constant 0 : i32
    %c0_i32_0 = arith.constant 0 : i32
    return %arg0, %c0_i32 : i32, i32
  }
}

</mosaic_0001>

<llo_original>
// kernel: tpu_custom_call.1
$region0: #{tpu_custom_call.1}
  #allocation0 [shape = 'u32[]', space=smem, size = 0x4, offset = 0x4, fixed_abs, tag = 'smem constant byte address 0x4 - core index']
  #allocation1 [shape = 'u32[144,128]{1,0:T(1,128)}', space=vmem, size = 0x12000, scoped, tag = 'internal scratch']
  %s0 = inlined_call_operand.hbm [shape: bf16[8,32], index: 0, kind: input, shape index: {}]
  %s1 = inlined_call_operand.hbm [shape: bf16[32,256], index: 1, kind: input, shape index: {}]
  %s2 = inlined_call_operand.vmem [shape: f32[1,256], index: 2, kind: input, shape index: {}]
  %s3 = inlined_call_operand.hbm [shape: bf16[256,256], index: 3, kind: input, shape index: {}]
  %s4 = inlined_call_operand.vmem [shape: f32[1,256], index: 4, kind: input, shape index: {}]
  %s5 = inlined_call_operand.hbm [shape: f32[8,256], index: 5, kind: output, shape index: {}]
  %s6 = sld [smem:[#allocation0]]
  $region42: #{tpu_custom_call.1} parent=0
    _
  %s8 = ssub.s32 1, %s6
  %s9 = scalar_select 0, %s8, %s6
  $region1: #{tpu_custom_call.1} parent=0
    #allocation2 [shape = 'u8[2048]{0}', space=vmem, size = 0x800, scoped, tag = 'input window, operand 0, single buffered']
    #allocation3 [shape = 's32[1]{0}', space=sflag, size = 0x4, scoped, tag = 'scoped memory for tpu_custom_call.1']
    #allocation4 [shape = 's32[1]{0}', space=sflag, size = 0x4, scoped, tag = 'scoped memory for tpu_custom_call.1']
    #allocation5 [shape = 'u8[16384]{0}', space=vmem, size = 0x4000, scoped, tag = 'input window, operand 1, single buffered']
    #allocation6 [shape = 's32[1]{0}', space=sflag, size = 0x4, scoped, tag = 'scoped memory for tpu_custom_call.1']
    #allocation7 [shape = 'u8[131072]{0}', space=vmem, size = 0x20000, scoped, tag = 'input window, operand 3, single buffered']
    #allocation8 [shape = 'u8[8192]{0}', space=vmem, size = 0x2000, scoped, tag = 'output window, operand 0, single buffered']
    %10 = vsyncpa [#allocation3], 0
    %11 = vsyncpa [#allocation6], 0
    %12 = vsyncpa [#allocation4], 0
    // Predicated region
    $region2: #{tpu_custom_call.1} parent=1 // pred_check
      _
    $region3: #{tpu_custom_call.1} parent=1 // pred_check_branch
      %14 = sbr.rel (0) target = $region5
    $region4: #{tpu_custom_call.1} parent=1 // pred_region
      %s16 = ssub.s32 64, 64
      %17 = vsyncadd [#allocation3], %s16
      %s19 = sshll.u32 [#allocation2], 4
      %s20 = int_to_ptr.vmem [resolvable:$true] %s19
      %22 = dma.hbm_to_vmem [thread:$0]  %s0, 64, %s20, [#allocation3]
    $region5: #{tpu_custom_call.1} parent=1 // pred_fallthru
      _
    // Predicated region
    $region6: #{tpu_custom_call.1} parent=1 // pred_check
      _
    $region7: #{tpu_custom_call.1} parent=1 // pred_check_branch
      %24 = sbr.rel (0) target = $region9
    $region8: #{tpu_custom_call.1} parent=1 // pred_region
      %s26 = ssub.s32 512, 512
      %27 = vsyncadd [#allocation6], %s26
      %s28 = sshll.u32 [#allocation5], 4
      %s29 = int_to_ptr.vmem [resolvable:$true] %s28
      %34 = dma.hbm_to_vmem [thread:$0]  %s1, 512, %s29, [#allocation6], 128, 128, 8
    $region9: #{tpu_custom_call.1} parent=1 // pred_fallthru
      _
    // Predicated region
    $region10: #{tpu_custom_call.1} parent=1 // pred_check
      _
    $region11: #{tpu_custom_call.1} parent=1 // pred_check_branch
      %36 = sbr.rel (0) target = $region13
    $region12: #{tpu_custom_call.1} parent=1 // pred_region
      _
    $region13: #{tpu_custom_call.1} parent=1 // pred_fallthru
      _
    // Predicated region
    $region14: #{tpu_custom_call.1} parent=1 // pred_check
      _
    $region15: #{tpu_custom_call.1} parent=1 // pred_check_branch
      %38 = sbr.rel (0) target = $region17
    $region16: #{tpu_custom_call.1} parent=1 // pred_region
      %s40 = ssub.s32 4096, 4096
      %41 = vsyncadd [#allocation6], %s40
      %s42 = sshll.u32 [#allocation7], 4
      %s43 = int_to_ptr.vmem [resolvable:$true] %s42
      %48 = dma.hbm_to_vmem [thread:$0]  %s3, 4096, %s43, [#allocation6], 128, 128, 8
    $region17: #{tpu_custom_call.1} parent=1 // pred_fallthru
      _
    // Predicated region
    $region18: #{tpu_custom_call.1} parent=1 // pred_check
      _
    $region19: #{tpu_custom_call.1} parent=1 // pred_check_branch
      %50 = sbr.rel (0) target = $region21
    $region20: #{tpu_custom_call.1} parent=1 // pred_region
      _
    $region21: #{tpu_custom_call.1} parent=1 // pred_fallthru
      _
    // Predicated region
    $region22: #{tpu_custom_call.1} parent=1 // pred_check
      _
    $region23: #{tpu_custom_call.1} parent=1 // pred_check_branch
      %52 = sbr.rel (0) target = $region25
    $region24: #{tpu_custom_call.1} parent=1 // pred_region
      %53 = dma.done [#allocation3], 64
    $region25: #{tpu_custom_call.1} parent=1 // pred_fallthru
      _
    // Predicated region
    $region26: #{tpu_custom_call.1} parent=1 // pred_check
      _
    $region27: #{tpu_custom_call.1} parent=1 // pred_check_branch
      %55 = sbr.rel (0) target = $region29
    $region28: #{tpu_custom_call.1} parent=1 // pred_region
      %56 = dma.done [#allocation6], 512
    $region29: #{tpu_custom_call.1} parent=1 // pred_fallthru
      _
    // Predicated region
    $region30: #{tpu_custom_call.1} parent=1 // pred_check
      _
    $region31: #{tpu_custom_call.1} parent=1 // pred_check_branch
      %58 = sbr.rel (0) target = $region33
    $region32: #{tpu_custom_call.1} parent=1 // pred_region
      %59 = dma.done [#allocation6], 4096
    $region33: #{tpu_custom_call.1} parent=1 // pred_fallthru
      _
    %v61 = vld [vmem:[#allocation2] sm:$0xf]
    %v62 = vld [vmem:[#allocation5] sm:$0xff]
    %v63 = vld [vmem:[#allocation5 + $0x8] sm:$0xff]
    %v64 = vld [vmem:[#allocation5 + $0x10] sm:$0xff]
    %v65 = vld [vmem:[#allocation5 + $0x18] sm:$0xff]
    %v66 = vld [vmem:[%s2] sm:$0x3]
    %v68 = vlaneseq
    %v69 = vshrl.u32 %v68, 7
    %v70 = vsub.s32 0, %v69
    %v71 = vrot.slane %v66, %v70
    %v72 = vlaneseq
    %v73 = vshrl.u32 %v72, 7
    %v74 = vsub.s32 1, %v73
    %v75 = vrot.slane %v66, %v74
    %v82 = vunpack.c.l.b16 %v62
    %v83 = vunpack.c.h.b16 %v62
    %v84 = vunpack.c.l.b16 %v63
    %v85 = vunpack.c.h.b16 %v63
    %v86 = vunpack.c.l.b16 %v64
    %v87 = vunpack.c.h.b16 %v64
    %v88 = vunpack.c.l.b16 %v65
    %v89 = vunpack.c.h.b16 %v65
    %v90 = vpack.c.b16 %v84, %v82
    %v91 = vpack.c.b16 %v85, %v83
    %v92 = vpack.c.b16 %v88, %v86
    %v93 = vpack.c.b16 %v89, %v87
    %vm98 = vcmask 261120
    %v100 = vsel %vm98, %v61, 0
    %102 = vmatprep.subr.bf16.mxu0 0
    %103 = vmatpush1.bf16.msra.mxu0 0
    %104 = vmatprep.subr.bf16.mxu0 0
    %105 = vmatpush1.bf16.msra.mxu0 0
    %106 = vmatprep.subr.bf16.mxu0 0
    %107 = vmatpush1.bf16.msra.mxu0 0
    %108 = vmatprep.subr.bf16.mxu0 0
    %109 = vmatpush1.bf16.msra.mxu0 0
    %110 = vmatprep.subr.bf16.mxu0 0
    %111 = vmatpush1.bf16.msra.mxu0 0
    %112 = vmatprep.subr.bf16.mxu0 0
    %113 = vmatpush1.bf16.msra.mxu0 0
    %114 = vmatprep.subr.bf16.mxu0 %v93
    %115 = vmatpush1.bf16.msra.mxu0 %v92
    %116 = vmatprep.subr.bf16.mxu0 %v91
    %117 = vmatpush1.bf16.msra.mxu0 %v90
    %118 = vmatprep.subr.bf16.mxu0 0
    %119 = vmatpush2.bf16.msra.mxu0 0
    %120 = vmatprep.subr.bf16.mxu0 0
    %121 = vmatpush2.bf16.msra.mxu0 0
    %122 = vmatprep.subr.bf16.mxu0 0
    %123 = vmatpush2.bf16.msra.mxu0 0
    %124 = vmatprep.subr.bf16.mxu0 0
    %125 = vmatpush2.bf16.msra.mxu0 0
    %126 = vmatprep.subr.bf16.mxu0 0
    %127 = vmatpush2.bf16.msra.mxu0 0
    %128 = vmatprep.subr.bf16.mxu0 0
    %129 = vmatpush2.bf16.msra.mxu0 0
    %130 = vmatprep.subr.bf16.mxu0 0
    %131 = vmatpush2.bf16.msra.mxu0 0
    %132 = vmatprep.subr.bf16.mxu0 0
    %133 = vmatpush2.bf16.msra.mxu0 0
    %134 = vmatprep.mubr.bf16.mxu0 0
    %135 = vmatmul.mubr.bf16.gmra.mxu0 %v100
    %v136 = vpop.f32.mrf.mxu0
    %v137 = vadd.f32 %v71, %v136
    %v138 = vpop.f32.mrf.mxu0
    %v139 = vadd.f32 %v75, %v138
    %v140 = vpop.f32.mrf.mxu0
    %v141 = vpop.f32.mrf.mxu0
    %142 = vdwg.mxu0
    %v143 = vmax.f32 %v137, 0.0
    %v144 = vmax.f32 %v139, 0.0
    %v145 = vpack.c.bf16 %v143, %v143
    %v146 = vpack.c.bf16 %v144, %v144
    %v147 = vld [vmem:[#allocation7] sm:$0xff]
    %v148 = vld [vmem:[#allocation7 + $0x8] sm:$0xff]
    %v149 = vld [vmem:[#allocation7 + $0x10] sm:$0xff]
    %v150 = vld [vmem:[#allocation7 + $0x18] sm:$0xff]
    %v151 = vld [vmem:[#allocation7 + $0x20] sm:$0xff]
    %v152 = vld [vmem:[#allocation7 + $0x28] sm:$0xff]
    %v153 = vld [vmem:[#allocation7 + $0x30] sm:$0xff]
    %v154 = vld [vmem:[#allocation7 + $0x38] sm:$0xff]
    %v155 = vld [vmem:[#allocation7 + $0x40] sm:$0xff]
    %v156 = vld [vmem:[#allocation7 + $0x48] sm:$0xff]
    %v157 = vld [vmem:[#allocation7 + $0x50] sm:$0xff]
    %v158 = vld [vmem:[#allocation7 + $0x58] sm:$0xff]
    %v159 = vld [vmem:[#allocation7 + $0x60] sm:$0xff]
    %v160 = vld [vmem:[#allocation7 + $0x68] sm:$0xff]
    %v161 = vld [vmem:[#allocation7 + $0x70] sm:$0xff]
    %v162 = vld [vmem:[#allocation7 + $0x78] sm:$0xff]
    %v163 = vld [vmem:[#allocation7 + $0x80] sm:$0xff]
    %v164 = vld [vmem:[#allocation7 + $0x88] sm:$0xff]
    %v165 = vld [vmem:[#allocation7 + $0x90] sm:$0xff]
    %v166 = vld [vmem:[#allocation7 + $0x98] sm:$0xff]
    %v167 = vld [vmem:[#allocation7 + $0xa0] sm:$0xff]
    %v168 = vld [vmem:[#allocation7 + $0xa8] sm:$0xff]
    %v169 = vld [vmem:[#allocation7 + $0xb0] sm:$0xff]
    %v170 = vld [vmem:[#allocation7 + $0xb8] sm:$0xff]
    %v171 = vld [vmem:[#allocation7 + $0xc0] sm:$0xff]
    %v172 = vld [vmem:[#allocation7 + $0xc8] sm:$0xff]
    %v173 = vld [vmem:[#allocation7 + $0xd0] sm:$0xff]
    %v174 = vld [vmem:[#allocation7 + $0xd8] sm:$0xff]
    %v175 = vld [vmem:[#allocation7 + $0xe0] sm:$0xff]
    %v176 = vld [vmem:[#allocation7 + $0xe8] sm:$0xff]
    %v177 = vld [vmem:[#allocation7 + $0xf0] sm:$0xff]
    %v178 = vld [vmem:[#allocation7 + $0xf8] sm:$0xff]
    %v179 = vld [vmem:[%s4] sm:$0x3]
    %v181 = vlaneseq
    %v182 = vshrl.u32 %v181, 7
    %v183 = vsub.s32 0, %v182
    %v184 = vrot.slane %v179, %v183
    %v185 = vlaneseq
    %v186 = vshrl.u32 %v185, 7
    %v187 = vsub.s32 1, %v186
    %v188 = vrot.slane %v179, %v187
    %v223 = vunpack.c.l.b16 %v147
    %v224 = vunpack.c.h.b16 %v147
    %v225 = vunpack.c.l.b16 %v148
    %v226 = vunpack.c.h.b16 %v148
    %v227 = vunpack.c.l.b16 %v149
    %v228 = vunpack.c.h.b16 %v149
    %v229 = vunpack.c.l.b16 %v150
    %v230 = vunpack.c.h.b16 %v150
    %v231 = vunpack.c.l.b16 %v151
    %v232 = vunpack.c.h.b16 %v151
    %v233 = vunpack.c.l.b16 %v152
    %v234 = vunpack.c.h.b16 %v152
    %v235 = vunpack.c.l.b16 %v153
    %v236 = vunpack.c.h.b16 %v153
    %v237 = vunpack.c.l.b16 %v154
    %v238 = vunpack.c.h.b16 %v154
    %v239 = vunpack.c.l.b16 %v155
    %v240 = vunpack.c.h.b16 %v155
    %v241 = vunpack.c.l.b16 %v156
    %v242 = vunpack.c.h.b16 %v156
    %v243 = vunpack.c.l.b16 %v157
    %v244 = vunpack.c.h.b16 %v157
    %v245 = vunpack.c.l.b16 %v158
    %v246 = vunpack.c.h.b16 %v158
    %v247 = vunpack.c.l.b16 %v159
    %v248 = vunpack.c.h.b16 %v159
    %v249 = vunpack.c.l.b16 %v160
    %v250 = vunpack.c.h.b16 %v160
    %v251 = vunpack.c.l.b16 %v161
    %v252 = vunpack.c.h.b16 %v161
    %v253 = vunpack.c.l.b16 %v162
    %v254 = vunpack.c.h.b16 %v162
    %v255 = vunpack.c.l.b16 %v163
    %v256 = vunpack.c.h.b16 %v163
    %v257 = vunpack.c.l.b16 %v164
    %v258 = vunpack.c.h.b16 %v164
    %v259 = vunpack.c.l.b16 %v165
    %v260 = vunpack.c.h.b16 %v165
    %v261 = vunpack.c.l.b16 %v166
    %v262 = vunpack.c.h.b16 %v166
    %v263 = vunpack.c.l.b16 %v167
    %v264 = vunpack.c.h.b16 %v167
    %v265 = vunpack.c.l.b16 %v168
    %v266 = vunpack.c.h.b16 %v168
    %v267 = vunpack.c.l.b16 %v169
    %v268 = vunpack.c.h.b16 %v169
    %v269 = vunpack.c.l.b16 %v170
    %v270 = vunpack.c.h.b16 %v170
    %v271 = vunpack.c.l.b16 %v171
    %v272 = vunpack.c.h.b16 %v171
    %v273 = vunpack.c.l.b16 %v172
    %v274 = vunpack.c.h.b16 %v172
    %v275 = vunpack.c.l.b16 %v173
    %v276 = vunpack.c.h.b16 %v173
    %v277 = vunpack.c.l.b16 %v174
    %v278 = vunpack.c.h.b16 %v174
    %v279 = vunpack.c.l.b16 %v175
    %v280 = vunpack.c.h.b16 %v175
    %v281 = vunpack.c.l.b16 %v176
    %v282 = vunpack.c.h.b16 %v176
    %v283 = vunpack.c.l.b16 %v177
    %v284 = vunpack.c.h.b16 %v177
    %v285 = vunpack.c.l.b16 %v178
    %v286 = vunpack.c.h.b16 %v178
    %v287 = vpack.c.b16 %v225, %v223
    %v288 = vpack.c.b16 %v226, %v224
    %v289 = vpack.c.b16 %v229, %v227
    %v290 = vpack.c.b16 %v230, %v228
    %v291 = vpack.c.b16 %v233, %v231
    %v292 = vpack.c.b16 %v234, %v232
    %v293 = vpack.c.b16 %v237, %v235
    %v294 = vpack.c.b16 %v238, %v236
    %v295 = vpack.c.b16 %v241, %v239
    %v296 = vpack.c.b16 %v242, %v240
    %v297 = vpack.c.b16 %v245, %v243
    %v298 = vpack.c.b16 %v246, %v244
    %v299 = vpack.c.b16 %v249, %v247
    %v300 = vpack.c.b16 %v250, %v248
    %v301 = vpack.c.b16 %v253, %v251
    %v302 = vpack.c.b16 %v254, %v252
    %v303 = vpack.c.b16 %v257, %v255
    %v304 = vpack.c.b16 %v258, %v256
    %v305 = vpack.c.b16 %v261, %v259
    %v306 = vpack.c.b16 %v262, %v260
    %v307 = vpack.c.b16 %v265, %v263
    %v308 = vpack.c.b16 %v266, %v264
    %v309 = vpack.c.b16 %v269, %v267
    %v310 = vpack.c.b16 %v270, %v268
    %v311 = vpack.c.b16 %v273, %v271
    %v312 = vpack.c.b16 %v274, %v272
    %v313 = vpack.c.b16 %v277, %v275
    %v314 = vpack.c.b16 %v278, %v276
    %v315 = vpack.c.b16 %v281, %v279
    %v316 = vpack.c.b16 %v282, %v280
    %v317 = vpack.c.b16 %v285, %v283
    %v318 = vpack.c.b16 %v286, %v284
    %351 = vmatprep.subr.bf16.mxu0 %v302
    %352 = vmatpush1.bf16.msra.mxu0 %v301
    %353 = vmatprep.subr.bf16.mxu0 %v300
    %354 = vmatpush1.bf16.msra.mxu0 %v299
    %355 = vmatprep.subr.bf16.mxu0 %v298
    %356 = vmatpush1.bf16.msra.mxu0 %v297
    %357 = vmatprep.subr.bf16.mxu0 %v296
    %358 = vmatpush1.bf16.msra.mxu0 %v295
    %359 = vmatprep.subr.bf16.mxu0 %v294
    %360 = vmatpush1.bf16.msra.mxu0 %v293
    %361 = vmatprep.subr.bf16.mxu0 %v292
    %362 = vmatpush1.bf16.msra.mxu0 %v291
    %363 = vmatprep.subr.bf16.mxu0 %v290
    %364 = vmatpush1.bf16.msra.mxu0 %v289
    %365 = vmatprep.subr.bf16.mxu0 %v288
    %366 = vmatpush1.bf16.msra.mxu0 %v287
    %367 = vmatprep.subr.bf16.mxu0 %v318
    %368 = vmatpush2.bf16.msra.mxu0 %v317
    %369 = vmatprep.subr.bf16.mxu0 %v316
    %370 = vmatpush2.bf16.msra.mxu0 %v315
    %371 = vmatprep.subr.bf16.mxu0 %v314
    %372 = vmatpush2.bf16.msra.mxu0 %v313
    %373 = vmatprep.subr.bf16.mxu0 %v312
    %374 = vmatpush2.bf16.msra.mxu0 %v311
    %375 = vmatprep.subr.bf16.mxu0 %v310
    %376 = vmatpush2.bf16.msra.mxu0 %v309
    %377 = vmatprep.subr.bf16.mxu0 %v308
    %378 = vmatpush2.bf16.msra.mxu0 %v307
    %379 = vmatprep.subr.bf16.mxu0 %v306
    %380 = vmatpush2.bf16.msra.mxu0 %v305
    %381 = vmatprep.subr.bf16.mxu0 %v304
    %382 = vmatpush2.bf16.msra.mxu0 %v303
    %383 = vmatprep.mubr.bf16.mxu0 %v146
    %384 = vmatmul.mubr.bf16.gmra.mxu0 %v145
    %v385 = vpop.f32.mrf.mxu0
    %v386 = vadd.f32 %v184, %v385
    %v387 = vpop.f32.mrf.mxu0
    %v388 = vadd.f32 %v188, %v387
    %v389 = vpop.f32.mrf.mxu0
    %v390 = vpop.f32.mrf.mxu0
    %391 = vdwg.mxu0
    %v392 = vmax.f32 %v386, 0.0
    %v393 = vmax.f32 %v388, 0.0
    %394 = vst [vmem:[#allocation8] sm:$0xff] %v392
    %395 = vst [vmem:[#allocation8 + $0x8] sm:$0xff] %v393
    // Predicated region
    $region34: #{tpu_custom_call.1} parent=1 // pred_check
      _
    $region35: #{tpu_custom_call.1} parent=1 // pred_check_branch
      %397 = sbr.rel (0) target = $region37
    $region36: #{tpu_custom_call.1} parent=1 // pred_region
      %s399 = ssub.s32 256, 256
      %400 = vsyncadd [#allocation4], %s399
      %s402 = sshll.u32 [#allocation8], 4
      %s403 = int_to_ptr.vmem [resolvable:$true] %s402
      %405 = dma.vmem_to_hbm [thread:$0]  %s403, 256, %s5, [#allocation4]
    $region37: #{tpu_custom_call.1} parent=1 // pred_fallthru
      _
    // Predicated region
    $region38: #{tpu_custom_call.1} parent=1 // pred_check
      _
    $region39: #{tpu_custom_call.1} parent=1 // pred_check_branch
      %407 = sbr.rel (0) target = $region41
    $region40: #{tpu_custom_call.1} parent=1 // pred_region
      %408 = dma.done [#allocation4], 256
    $region41: #{tpu_custom_call.1} parent=1 // pred_fallthru
      _
    %409 = vsyncpa [#allocation3], 1
    %410 = vsyncpa [#allocation6], 1
    %411 = vsyncpa [#allocation4], 1

</llo_original>
